<compile_context>
chip_gen: v6e
topology: v6e:2x2x1
jax: 0.10.0
libtpu: 0.0.40
codegen_flags: <defaults>
</compile_context>

<pallas_src>
import jax
import jax.numpy as jnp
from jax.experimental import pallas as pl
from jax.experimental.pallas import tpu as pltpu

# ---- model hyperparameters (from the PyTorch module) -----------------------
INPUT_DIM = 1
HIDDEN = 2
NUM_LAYERS = 1
OUTPUT_DIM = 1
NUM_GATES = 4          # PyTorch gate order: i, f, g, o
LANE = 128             # TPU lane width
MAX_TILE_B = 256       # batch tile cap (multiple of 128); raise after spill check


def lstm_kernel(x_ref, wpack_ref, fc_ref, out_ref):
    """Full LSTM recurrence + final linear layer for one batch tile.

    x_ref     : (S, B)      input sequence, batch on lanes (input_dim == 1)
    wpack_ref : (4H, 2+H)   packed weights: [:,0]=W_ih col, [:,1]=b_ih+b_hh,
                            [:,2:2+H]=W_hh columns; i/f/o rows pre-scaled 0.5
    fc_ref    : (H+1,) SMEM fc weights then bias: [w0, w1, b]
    out_ref   : (1, B)      lane-dense output slab
    """
    S, B = x_ref.shape
    G = wpack_ref.shape[0]              # 4*H (== 8)
    H = G // NUM_GATES

    x = x_ref[...]                      # (S, B)
    wpack = wpack_ref[...]              # (G, 2+H)

    # ---- lane broadcasts of the tiny weight block: once per grid step ------
    wih_b = jnp.broadcast_to(wpack[:, 0:1], (G, B))
    bias_b = jnp.broadcast_to(wpack[:, 1:2], (G, B))
    whh_b = [jnp.broadcast_to(wpack[:, 2 + j:3 + j], (G, B)) for j in range(H)]

    # ---- per-sublane affine turning tanh(z/2) into sigmoid(z) on i/f/o -----
    row = jax.lax.broadcasted_iota(jnp.int32, (G, B), 0)
    is_g = (row >= 2 * H) & (row < 3 * H)                    # g-gate rows
    gate_scale = jnp.where(is_g, 1.0, 0.5).astype(jnp.float32)
    gate_shift = jnp.where(is_g, 0.0, 0.5).astype(jnp.float32)

    # ---- hoisted, sublane-packed input projection: pre[t] is (G, B) --------
    pre = [jnp.broadcast_to(x[t:t + 1, :], (G, B)) * wih_b + bias_b
           for t in range(S)]

    h = jnp.zeros((H, B), jnp.float32)
    c = jnp.zeros((H, B), jnp.float32)

    # ---- fully-unrolled recurrence (S static & small) -----------------------
    for t in range(S):
        raw = pre[t]                                          # (G, B)
        for j in range(H):
            raw = raw + whh_b[j] * jnp.broadcast_to(h[j:j + 1, :], (G, B))
        t_all = jnp.tanh(raw)                                 # one wide EUP push
        act = t_all * gate_scale + gate_shift                 # sigmoid(i,f,o), tanh(g)
        i_g = act[0 * H:1 * H]
        f_g = act[1 * H:2 * H]
        g_g = act[2 * H:3 * H]
        o_g = act[3 * H:4 * H]
        c = f_g * c + i_g * g_g
        h = o_g * jnp.tanh(c)

    # ---- fc epilogue: SMEM scalar * vector, lane-dense (1, B) slab ----------
    out_row = h[0:1, :] * fc_ref[0]
    for j in range(1, H):
        out_row = out_row + h[j:j + 1, :] * fc_ref[j]
    out_row = out_row + fc_ref[H]
    out_ref[...] = out_row.astype(out_ref.dtype)


def _choose_tile(B):
    """Batch tile size / padded batch / number of tiles."""
    if B <= LANE:
        return B, B, 1
    b128 = ((B + LANE - 1) // LANE) * LANE
    half = ((b128 // 2 + LANE - 1) // LANE) * LANE     # aim for >= 2 tiles (v7x)
    bt = max(LANE, min(MAX_TILE_B, half))
    bp = ((B + bt - 1) // bt) * bt
    return bt, bp, bp // bt


@jax.jit
def lstm_forward(x, params):
    """x: (B, S, 1) float32 (PyTorch batch_first input). Returns (B, 1)."""
    B, S, _ = x.shape
    bt, Bp, nb = _choose_tile(B)

    # batch -> lanes; pad fuses with the transpose under jit (single HBM copy)
    x_sb = jnp.transpose(x[..., 0], (1, 0))                   # (S, B)
    if Bp != B:
        x_sb = jnp.pad(x_sb, ((0, 0), (0, Bp - B)))

    out = pl.pallas_call(
        lstm_kernel,
        out_shape=jax.ShapeDtypeStruct((1, Bp), jnp.float32),
        grid=(nb,),
        in_specs=[
            pl.BlockSpec((S, bt), lambda b: (0, b)),                       # x tile
            pl.BlockSpec(params["wpack"].shape, lambda b: (0, 0)),         # packed weights
            pl.BlockSpec(memory_space=pltpu.MemorySpace.SMEM),             # fc scalars
        ],
        out_specs=pl.BlockSpec((1, bt), lambda b: (0, b)),
        compiler_params=pltpu.CompilerParams(
            dimension_semantics=("parallel",)),    # batch tiles split across TCs (v7x)
    )(x_sb, params["wpack"], params["fc"])

    return jnp.transpose(out[:, :B], (1, 0))                  # (B, 1)


def init_params(key):
    """Deterministic init mirroring PyTorch shapes (uniform(-k, k), k=1/sqrt(H))."""
    k = 1.0 / jnp.sqrt(jnp.float32(HIDDEN))
    ks = jax.random.split(key, 6)
    w_ih = jax.random.uniform(ks[0], (4 * HIDDEN, INPUT_DIM), jnp.float32, -k, k)
    w_hh = jax.random.uniform(ks[1], (4 * HIDDEN, HIDDEN), jnp.float32, -k, k)
    b_ih = jax.random.uniform(ks[2], (4 * HIDDEN,), jnp.float32, -k, k)
    b_hh = jax.random.uniform(ks[3], (4 * HIDDEN,), jnp.float32, -k, k)
    w_fc = jax.random.uniform(ks[4], (OUTPUT_DIM, HIDDEN), jnp.float32, -k, k)
    b_fc = jax.random.uniform(ks[5], (OUTPUT_DIM,), jnp.float32, -k, k)

    # ---- kernel-layout packing (done once, in the wrapper) -------------------
    G = NUM_GATES * HIDDEN
    gate_idx = jnp.arange(G) // HIDDEN                        # 0=i,1=f,2=g,3=o
    # 0.5 pre-scale on i/f/o rows so sigmoid(z) == 0.5*tanh(z/2) + 0.5 in-kernel
    rscale = jnp.where(gate_idx == 2, 1.0, 0.5).astype(jnp.float32)[:, None]
    wih_col = w_ih[:, 0:1] * rscale                           # (G, 1)
    bias_col = (b_ih + b_hh)[:, None] * rscale                # (G, 1)
    whh_sc = w_hh * rscale                                    # (G, H)
    wpack = jnp.concatenate([wih_col, bias_col, whh_sc], axis=1)   # (G, 2+H)
    fc = jnp.concatenate([w_fc[0, :], b_fc]).astype(jnp.float32)   # (H+1,)

    return {
        "wpack": wpack, "fc": fc,
        # originals for the reference check
        "_w_ih": w_ih, "_w_hh": w_hh, "_b_ih": b_ih, "_b_hh": b_hh,
        "_w_fc": w_fc, "_b_fc": b_fc,
    }


def lstm_reference(x, params):
    """Pure-JAX reference mirroring torch.nn.LSTM + Linear semantics."""
    B, S, _ = x.shape
    w_ih, w_hh = params["_w_ih"], params["_w_hh"]
    b = params["_b_ih"] + params["_b_hh"]
    h = jnp.zeros((B, HIDDEN), jnp.float32)
    c = jnp.zeros((B, HIDDEN), jnp.float32)
    for t in range(S):
        x_t = x[:, t, :]                                      # (B, 1)
        gates = x_t @ w_ih.T + h @ w_hh.T + b                 # (B, 4H)
        i = jax.nn.sigmoid(gates[:, 0 * HIDDEN:1 * HIDDEN])
        f = jax.nn.sigmoid(gates[:, 1 * HIDDEN:2 * HIDDEN])
        g = jnp.tanh(gates[:, 2 * HIDDEN:3 * HIDDEN])
        o = jax.nn.sigmoid(gates[:, 3 * HIDDEN:4 * HIDDEN])
        c = f * c + i * g
        h = o * jnp.tanh(c)
    return h @ params["_w_fc"].T + params["_b_fc"]            # (B, 1)


if __name__ == "__main__":
    key = jax.random.PRNGKey(0)
    k_param, k_x1, k_x2 = jax.random.split(key, 3)
    params = init_params(k_param)
    S = 8

    # small case: single block, no padding
    B1 = 4
    x1 = jax.random.normal(k_x1, (B1, S, INPUT_DIM), jnp.float32)
    out1 = jax.block_until_ready(lstm_forward(x1, params))
    ref1 = lstm_reference(x1, params)
    assert out1.shape == (B1, OUTPUT_DIM), out1.shape
    assert jnp.allclose(out1, ref1, atol=1e-5, rtol=1e-5), (out1, ref1)

    # tiled case: exercises the batch grid, padding and the parallel axis
    B2 = 160
    x2 = jax.random.normal(k_x2, (B2, S, INPUT_DIM), jnp.float32)
    out2 = jax.block_until_ready(lstm_forward(x2, params))
    ref2 = lstm_reference(x2, params)
    assert out2.shape == (B2, OUTPUT_DIM), out2.shape
    assert jnp.allclose(out2, ref2, atol=1e-5, rtol=1e-5), (out2, ref2)

    print("KERNEL_OK")
</pallas_src>

<mosaic_0001>
module attributes {stable_mosaic.version = 11 : i64} {
  func.func @lstm_kernel(%arg0: i32, %arg1: memref<8x4xf32, #tpu.memory_space<vmem>>, %arg2: memref<8x4xf32, #tpu.memory_space<vmem>>, %arg3: memref<3xf32, #tpu.memory_space<smem>>, %arg4: memref<1x4xf32, #tpu.memory_space<vmem>>) attributes {dimension_semantics = [#tpu.dimension_semantics<parallel>], iteration_bounds = array<i64: 1>, scalar_prefetch = 0 : i64, scratch_operands = 0 : i64, tpu.core_type = #tpu.core_type<tc>, window_params = [{transform_indices = @transform_0, window_bounds = array<i64: 8, 4>}, {pipeline_mode = #tpu.pipeline_mode<synchronous>, transform_indices = @transform_1, window_bounds = array<i64: 8, 4>}, {transform_indices = @transform_2, window_bounds = array<i64: 3>}, {transform_indices = @transform_3, window_bounds = array<i64: 1, 4>}]} {
    %c0 = arith.constant 0 : index
    %c0_0 = arith.constant 0 : index
    %0 = vector.load %arg1[%c0, %c0_0] : memref<8x4xf32, #tpu.memory_space<vmem>>, vector<8x4xf32>
    %c0_1 = arith.constant 0 : index
    %c0_2 = arith.constant 0 : index
    %1 = vector.load %arg2[%c0_1, %c0_2] : memref<8x4xf32, #tpu.memory_space<vmem>>, vector<8x4xf32>
    %2 = vector.extract_strided_slice %1 {offsets = [0, 0], sizes = [8, 1], strides = [1, 1]} : vector<8x4xf32> to vector<8x1xf32>
    %3 = vector.shape_cast %2 : vector<8x1xf32> to vector<8x1xf32>
    %4 = vector.broadcast %3 : vector<8x1xf32> to vector<8x4xf32>
    %5 = vector.extract_strided_slice %1 {offsets = [0, 1], sizes = [8, 1], strides = [1, 1]} : vector<8x4xf32> to vector<8x1xf32>
    %6 = vector.shape_cast %5 : vector<8x1xf32> to vector<8x1xf32>
    %7 = vector.broadcast %6 : vector<8x1xf32> to vector<8x4xf32>
    %8 = vector.extract_strided_slice %1 {offsets = [0, 2], sizes = [8, 1], strides = [1, 1]} : vector<8x4xf32> to vector<8x1xf32>
    %9 = vector.shape_cast %8 : vector<8x1xf32> to vector<8x1xf32>
    %10 = vector.broadcast %9 : vector<8x1xf32> to vector<8x4xf32>
    %11 = vector.extract_strided_slice %1 {offsets = [0, 3], sizes = [8, 1], strides = [1, 1]} : vector<8x4xf32> to vector<8x1xf32>
    %12 = vector.shape_cast %11 : vector<8x1xf32> to vector<8x1xf32>
    %13 = vector.broadcast %12 : vector<8x1xf32> to vector<8x4xf32>
    %14 = tpu.iota {dimensions = array<i32: 0>} : vector<8x4xi32>
    %c4_i32 = arith.constant 4 : i32
    %15 = vector.broadcast %c4_i32 : i32 to vector<8x4xi32>
    %16 = arith.cmpi sge, %14, %15 : vector<8x4xi32>
    %c6_i32 = arith.constant 6 : i32
    %17 = vector.broadcast %c6_i32 : i32 to vector<8x4xi32>
    %18 = arith.cmpi slt, %14, %17 : vector<8x4xi32>
    %19 = arith.andi %16, %18 : vector<8x4xi1>
    %cst = arith.constant 1.000000e+00 : f32
    %cst_3 = arith.constant 5.000000e-01 : f32
    %20 = vector.broadcast %cst : f32 to vector<8x4xf32>
    %21 = vector.broadcast %cst_3 : f32 to vector<8x4xf32>
    %22 = arith.select %19, %20, %21 : vector<8x4xi1>, vector<8x4xf32>
    %cst_4 = arith.constant 0.000000e+00 : f32
    %cst_5 = arith.constant 5.000000e-01 : f32
    %23 = vector.broadcast %cst_4 : f32 to vector<8x4xf32>
    %24 = vector.broadcast %cst_5 : f32 to vector<8x4xf32>
    %25 = arith.select %19, %23, %24 : vector<8x4xi1>, vector<8x4xf32>
    %26 = vector.extract_strided_slice %0 {offsets = [0, 0], sizes = [1, 4], strides = [1, 1]} : vector<8x4xf32> to vector<1x4xf32>
    %27 = vector.shape_cast %26 : vector<1x4xf32> to vector<1x4xf32>
    %28 = vector.broadcast %27 : vector<1x4xf32> to vector<8x4xf32>
    %29 = arith.mulf %28, %4 : vector<8x4xf32>
    %30 = arith.addf %29, %7 : vector<8x4xf32>
    %31 = vector.extract_strided_slice %0 {offsets = [1, 0], sizes = [1, 4], strides = [1, 1]} : vector<8x4xf32> to vector<1x4xf32>
    %32 = vector.shape_cast %31 : vector<1x4xf32> to vector<1x4xf32>
    %33 = vector.broadcast %32 : vector<1x4xf32> to vector<8x4xf32>
    %34 = arith.mulf %33, %4 : vector<8x4xf32>
    %35 = arith.addf %34, %7 : vector<8x4xf32>
    %36 = vector.extract_strided_slice %0 {offsets = [2, 0], sizes = [1, 4], strides = [1, 1]} : vector<8x4xf32> to vector<1x4xf32>
    %37 = vector.shape_cast %36 : vector<1x4xf32> to vector<1x4xf32>
    %38 = vector.broadcast %37 : vector<1x4xf32> to vector<8x4xf32>
    %39 = arith.mulf %38, %4 : vector<8x4xf32>
    %40 = arith.addf %39, %7 : vector<8x4xf32>
    %41 = vector.extract_strided_slice %0 {offsets = [3, 0], sizes = [1, 4], strides = [1, 1]} : vector<8x4xf32> to vector<1x4xf32>
    %42 = vector.shape_cast %41 : vector<1x4xf32> to vector<1x4xf32>
    %43 = vector.broadcast %42 : vector<1x4xf32> to vector<8x4xf32>
    %44 = arith.mulf %43, %4 : vector<8x4xf32>
    %45 = arith.addf %44, %7 : vector<8x4xf32>
    %46 = vector.extract_strided_slice %0 {offsets = [4, 0], sizes = [1, 4], strides = [1, 1]} : vector<8x4xf32> to vector<1x4xf32>
    %47 = vector.shape_cast %46 : vector<1x4xf32> to vector<1x4xf32>
    %48 = vector.broadcast %47 : vector<1x4xf32> to vector<8x4xf32>
    %49 = arith.mulf %48, %4 : vector<8x4xf32>
    %50 = arith.addf %49, %7 : vector<8x4xf32>
    %51 = vector.extract_strided_slice %0 {offsets = [5, 0], sizes = [1, 4], strides = [1, 1]} : vector<8x4xf32> to vector<1x4xf32>
    %52 = vector.shape_cast %51 : vector<1x4xf32> to vector<1x4xf32>
    %53 = vector.broadcast %52 : vector<1x4xf32> to vector<8x4xf32>
    %54 = arith.mulf %53, %4 : vector<8x4xf32>
    %55 = arith.addf %54, %7 : vector<8x4xf32>
    %56 = vector.extract_strided_slice %0 {offsets = [6, 0], sizes = [1, 4], strides = [1, 1]} : vector<8x4xf32> to vector<1x4xf32>
    %57 = vector.shape_cast %56 : vector<1x4xf32> to vector<1x4xf32>
    %58 = vector.broadcast %57 : vector<1x4xf32> to vector<8x4xf32>
    %59 = arith.mulf %58, %4 : vector<8x4xf32>
    %60 = arith.addf %59, %7 : vector<8x4xf32>
    %61 = vector.extract_strided_slice %0 {offsets = [7, 0], sizes = [1, 4], strides = [1, 1]} : vector<8x4xf32> to vector<1x4xf32>
    %62 = vector.shape_cast %61 : vector<1x4xf32> to vector<1x4xf32>
    %63 = vector.broadcast %62 : vector<1x4xf32> to vector<8x4xf32>
    %64 = arith.mulf %63, %4 : vector<8x4xf32>
    %65 = arith.addf %64, %7 : vector<8x4xf32>
    %cst_6 = arith.constant 0.000000e+00 : f32
    %66 = vector.broadcast %cst_6 : f32 to vector<2x4xf32>
    %cst_7 = arith.constant 0.000000e+00 : f32
    %67 = vector.broadcast %cst_7 : f32 to vector<2x4xf32>
    %68 = vector.extract_strided_slice %66 {offsets = [0, 0], sizes = [1, 4], strides = [1, 1]} : vector<2x4xf32> to vector<1x4xf32>
    %69 = vector.shape_cast %68 : vector<1x4xf32> to vector<1x4xf32>
    %70 = vector.broadcast %69 : vector<1x4xf32> to vector<8x4xf32>
    %71 = arith.mulf %10, %70 : vector<8x4xf32>
    %72 = arith.addf %30, %71 : vector<8x4xf32>
    %73 = vector.extract_strided_slice %66 {offsets = [1, 0], sizes = [1, 4], strides = [1, 1]} : vector<2x4xf32> to vector<1x4xf32>
    %74 = vector.shape_cast %73 : vector<1x4xf32> to vector<1x4xf32>
    %75 = vector.broadcast %74 : vector<1x4xf32> to vector<8x4xf32>
    %76 = arith.mulf %13, %75 : vector<8x4xf32>
    %77 = arith.addf %72, %76 : vector<8x4xf32>
    %78 = math.tanh %77 : vector<8x4xf32>
    %79 = arith.mulf %78, %22 : vector<8x4xf32>
    %80 = arith.addf %79, %25 : vector<8x4xf32>
    %81 = vector.extract_strided_slice %80 {offsets = [0, 0], sizes = [2, 4], strides = [1, 1]} : vector<8x4xf32> to vector<2x4xf32>
    %82 = vector.extract_strided_slice %80 {offsets = [2, 0], sizes = [2, 4], strides = [1, 1]} : vector<8x4xf32> to vector<2x4xf32>
    %83 = vector.extract_strided_slice %80 {offsets = [4, 0], sizes = [2, 4], strides = [1, 1]} : vector<8x4xf32> to vector<2x4xf32>
    %84 = vector.extract_strided_slice %80 {offsets = [6, 0], sizes = [2, 4], strides = [1, 1]} : vector<8x4xf32> to vector<2x4xf32>
    %85 = arith.mulf %82, %67 : vector<2x4xf32>
    %86 = arith.mulf %81, %83 : vector<2x4xf32>
    %87 = arith.addf %85, %86 : vector<2x4xf32>
    %88 = math.tanh %87 : vector<2x4xf32>
    %89 = arith.mulf %84, %88 : vector<2x4xf32>
    %90 = vector.extract_strided_slice %89 {offsets = [0, 0], sizes = [1, 4], strides = [1, 1]} : vector<2x4xf32> to vector<1x4xf32>
    %91 = vector.shape_cast %90 : vector<1x4xf32> to vector<1x4xf32>
    %92 = vector.broadcast %91 : vector<1x4xf32> to vector<8x4xf32>
    %93 = arith.mulf %10, %92 : vector<8x4xf32>
    %94 = arith.addf %35, %93 : vector<8x4xf32>
    %95 = vector.extract_strided_slice %89 {offsets = [1, 0], sizes = [1, 4], strides = [1, 1]} : vector<2x4xf32> to vector<1x4xf32>
    %96 = vector.shape_cast %95 : vector<1x4xf32> to vector<1x4xf32>
    %97 = vector.broadcast %96 : vector<1x4xf32> to vector<8x4xf32>
    %98 = arith.mulf %13, %97 : vector<8x4xf32>
    %99 = arith.addf %94, %98 : vector<8x4xf32>
    %100 = math.tanh %99 : vector<8x4xf32>
    %101 = arith.mulf %100, %22 : vector<8x4xf32>
    %102 = arith.addf %101, %25 : vector<8x4xf32>
    %103 = vector.extract_strided_slice %102 {offsets = [0, 0], sizes = [2, 4], strides = [1, 1]} : vector<8x4xf32> to vector<2x4xf32>
    %104 = vector.extract_strided_slice %102 {offsets = [2, 0], sizes = [2, 4], strides = [1, 1]} : vector<8x4xf32> to vector<2x4xf32>
    %105 = vector.extract_strided_slice %102 {offsets = [4, 0], sizes = [2, 4], strides = [1, 1]} : vector<8x4xf32> to vector<2x4xf32>
    %106 = vector.extract_strided_slice %102 {offsets = [6, 0], sizes = [2, 4], strides = [1, 1]} : vector<8x4xf32> to vector<2x4xf32>
    %107 = arith.mulf %104, %87 : vector<2x4xf32>
    %108 = arith.mulf %103, %105 : vector<2x4xf32>
    %109 = arith.addf %107, %108 : vector<2x4xf32>
    %110 = math.tanh %109 : vector<2x4xf32>
    %111 = arith.mulf %106, %110 : vector<2x4xf32>
    %112 = vector.extract_strided_slice %111 {offsets = [0, 0], sizes = [1, 4], strides = [1, 1]} : vector<2x4xf32> to vector<1x4xf32>
    %113 = vector.shape_cast %112 : vector<1x4xf32> to vector<1x4xf32>
    %114 = vector.broadcast %113 : vector<1x4xf32> to vector<8x4xf32>
    %115 = arith.mulf %10, %114 : vector<8x4xf32>
    %116 = arith.addf %40, %115 : vector<8x4xf32>
    %117 = vector.extract_strided_slice %111 {offsets = [1, 0], sizes = [1, 4], strides = [1, 1]} : vector<2x4xf32> to vector<1x4xf32>
    %118 = vector.shape_cast %117 : vector<1x4xf32> to vector<1x4xf32>
    %119 = vector.broadcast %118 : vector<1x4xf32> to vector<8x4xf32>
    %120 = arith.mulf %13, %119 : vector<8x4xf32>
    %121 = arith.addf %116, %120 : vector<8x4xf32>
    %122 = math.tanh %121 : vector<8x4xf32>
    %123 = arith.mulf %122, %22 : vector<8x4xf32>
    %124 = arith.addf %123, %25 : vector<8x4xf32>
    %125 = vector.extract_strided_slice %124 {offsets = [0, 0], sizes = [2, 4], strides = [1, 1]} : vector<8x4xf32> to vector<2x4xf32>
    %126 = vector.extract_strided_slice %124 {offsets = [2, 0], sizes = [2, 4], strides = [1, 1]} : vector<8x4xf32> to vector<2x4xf32>
    %127 = vector.extract_strided_slice %124 {offsets = [4, 0], sizes = [2, 4], strides = [1, 1]} : vector<8x4xf32> to vector<2x4xf32>
    %128 = vector.extract_strided_slice %124 {offsets = [6, 0], sizes = [2, 4], strides = [1, 1]} : vector<8x4xf32> to vector<2x4xf32>
    %129 = arith.mulf %126, %109 : vector<2x4xf32>
    %130 = arith.mulf %125, %127 : vector<2x4xf32>
    %131 = arith.addf %129, %130 : vector<2x4xf32>
    %132 = math.tanh %131 : vector<2x4xf32>
    %133 = arith.mulf %128, %132 : vector<2x4xf32>
    %134 = vector.extract_strided_slice %133 {offsets = [0, 0], sizes = [1, 4], strides = [1, 1]} : vector<2x4xf32> to vector<1x4xf32>
    %135 = vector.shape_cast %134 : vector<1x4xf32> to vector<1x4xf32>
    %136 = vector.broadcast %135 : vector<1x4xf32> to vector<8x4xf32>
    %137 = arith.mulf %10, %136 : vector<8x4xf32>
    %138 = arith.addf %45, %137 : vector<8x4xf32>
    %139 = vector.extract_strided_slice %133 {offsets = [1, 0], sizes = [1, 4], strides = [1, 1]} : vector<2x4xf32> to vector<1x4xf32>
    %140 = vector.shape_cast %139 : vector<1x4xf32> to vector<1x4xf32>
    %141 = vector.broadcast %140 : vector<1x4xf32> to vector<8x4xf32>
    %142 = arith.mulf %13, %141 : vector<8x4xf32>
    %143 = arith.addf %138, %142 : vector<8x4xf32>
    %144 = math.tanh %143 : vector<8x4xf32>
    %145 = arith.mulf %144, %22 : vector<8x4xf32>
    %146 = arith.addf %145, %25 : vector<8x4xf32>
    %147 = vector.extract_strided_slice %146 {offsets = [0, 0], sizes = [2, 4], strides = [1, 1]} : vector<8x4xf32> to vector<2x4xf32>
    %148 = vector.extract_strided_slice %146 {offsets = [2, 0], sizes = [2, 4], strides = [1, 1]} : vector<8x4xf32> to vector<2x4xf32>
    %149 = vector.extract_strided_slice %146 {offsets = [4, 0], sizes = [2, 4], strides = [1, 1]} : vector<8x4xf32> to vector<2x4xf32>
    %150 = vector.extract_strided_slice %146 {offsets = [6, 0], sizes = [2, 4], strides = [1, 1]} : vector<8x4xf32> to vector<2x4xf32>
    %151 = arith.mulf %148, %131 : vector<2x4xf32>
    %152 = arith.mulf %147, %149 : vector<2x4xf32>
    %153 = arith.addf %151, %152 : vector<2x4xf32>
    %154 = math.tanh %153 : vector<2x4xf32>
    %155 = arith.mulf %150, %154 : vector<2x4xf32>
    %156 = vector.extract_strided_slice %155 {offsets = [0, 0], sizes = [1, 4], strides = [1, 1]} : vector<2x4xf32> to vector<1x4xf32>
    %157 = vector.shape_cast %156 : vector<1x4xf32> to vector<1x4xf32>
    %158 = vector.broadcast %157 : vector<1x4xf32> to vector<8x4xf32>
    %159 = arith.mulf %10, %158 : vector<8x4xf32>
    %160 = arith.addf %50, %159 : vector<8x4xf32>
    %161 = vector.extract_strided_slice %155 {offsets = [1, 0], sizes = [1, 4], strides = [1, 1]} : vector<2x4xf32> to vector<1x4xf32>
    %162 = vector.shape_cast %161 : vector<1x4xf32> to vector<1x4xf32>
    %163 = vector.broadcast %162 : vector<1x4xf32> to vector<8x4xf32>
    %164 = arith.mulf %13, %163 : vector<8x4xf32>
    %165 = arith.addf %160, %164 : vector<8x4xf32>
    %166 = math.tanh %165 : vector<8x4xf32>
    %167 = arith.mulf %166, %22 : vector<8x4xf32>
    %168 = arith.addf %167, %25 : vector<8x4xf32>
    %169 = vector.extract_strided_slice %168 {offsets = [0, 0], sizes = [2, 4], strides = [1, 1]} : vector<8x4xf32> to vector<2x4xf32>
    %170 = vector.extract_strided_slice %168 {offsets = [2, 0], sizes = [2, 4], strides = [1, 1]} : vector<8x4xf32> to vector<2x4xf32>
    %171 = vector.extract_strided_slice %168 {offsets = [4, 0], sizes = [2, 4], strides = [1, 1]} : vector<8x4xf32> to vector<2x4xf32>
    %172 = vector.extract_strided_slice %168 {offsets = [6, 0], sizes = [2, 4], strides = [1, 1]} : vector<8x4xf32> to vector<2x4xf32>
    %173 = arith.mulf %170, %153 : vector<2x4xf32>
    %174 = arith.mulf %169, %171 : vector<2x4xf32>
    %175 = arith.addf %173, %174 : vector<2x4xf32>
    %176 = math.tanh %175 : vector<2x4xf32>
    %177 = arith.mulf %172, %176 : vector<2x4xf32>
    %178 = vector.extract_strided_slice %177 {offsets = [0, 0], sizes = [1, 4], strides = [1, 1]} : vector<2x4xf32> to vector<1x4xf32>
    %179 = vector.shape_cast %178 : vector<1x4xf32> to vector<1x4xf32>
    %180 = vector.broadcast %179 : vector<1x4xf32> to vector<8x4xf32>
    %181 = arith.mulf %10, %180 : vector<8x4xf32>
    %182 = arith.addf %55, %181 : vector<8x4xf32>
    %183 = vector.extract_strided_slice %177 {offsets = [1, 0], sizes = [1, 4], strides = [1, 1]} : vector<2x4xf32> to vector<1x4xf32>
    %184 = vector.shape_cast %183 : vector<1x4xf32> to vector<1x4xf32>
    %185 = vector.broadcast %184 : vector<1x4xf32> to vector<8x4xf32>
    %186 = arith.mulf %13, %185 : vector<8x4xf32>
    %187 = arith.addf %182, %186 : vector<8x4xf32>
    %188 = math.tanh %187 : vector<8x4xf32>
    %189 = arith.mulf %188, %22 : vector<8x4xf32>
    %190 = arith.addf %189, %25 : vector<8x4xf32>
    %191 = vector.extract_strided_slice %190 {offsets = [0, 0], sizes = [2, 4], strides = [1, 1]} : vector<8x4xf32> to vector<2x4xf32>
    %192 = vector.extract_strided_slice %190 {offsets = [2, 0], sizes = [2, 4], strides = [1, 1]} : vector<8x4xf32> to vector<2x4xf32>
    %193 = vector.extract_strided_slice %190 {offsets = [4, 0], sizes = [2, 4], strides = [1, 1]} : vector<8x4xf32> to vector<2x4xf32>
    %194 = vector.extract_strided_slice %190 {offsets = [6, 0], sizes = [2, 4], strides = [1, 1]} : vector<8x4xf32> to vector<2x4xf32>
    %195 = arith.mulf %192, %175 : vector<2x4xf32>
    %196 = arith.mulf %191, %193 : vector<2x4xf32>
    %197 = arith.addf %195, %196 : vector<2x4xf32>
    %198 = math.tanh %197 : vector<2x4xf32>
    %199 = arith.mulf %194, %198 : vector<2x4xf32>
    %200 = vector.extract_strided_slice %199 {offsets = [0, 0], sizes = [1, 4], strides = [1, 1]} : vector<2x4xf32> to vector<1x4xf32>
    %201 = vector.shape_cast %200 : vector<1x4xf32> to vector<1x4xf32>
    %202 = vector.broadcast %201 : vector<1x4xf32> to vector<8x4xf32>
    %203 = arith.mulf %10, %202 : vector<8x4xf32>
    %204 = arith.addf %60, %203 : vector<8x4xf32>
    %205 = vector.extract_strided_slice %199 {offsets = [1, 0], sizes = [1, 4], strides = [1, 1]} : vector<2x4xf32> to vector<1x4xf32>
    %206 = vector.shape_cast %205 : vector<1x4xf32> to vector<1x4xf32>
    %207 = vector.broadcast %206 : vector<1x4xf32> to vector<8x4xf32>
    %208 = arith.mulf %13, %207 : vector<8x4xf32>
    %209 = arith.addf %204, %208 : vector<8x4xf32>
    %210 = math.tanh %209 : vector<8x4xf32>
    %211 = arith.mulf %210, %22 : vector<8x4xf32>
    %212 = arith.addf %211, %25 : vector<8x4xf32>
    %213 = vector.extract_strided_slice %212 {offsets = [0, 0], sizes = [2, 4], strides = [1, 1]} : vector<8x4xf32> to vector<2x4xf32>
    %214 = vector.extract_strided_slice %212 {offsets = [2, 0], sizes = [2, 4], strides = [1, 1]} : vector<8x4xf32> to vector<2x4xf32>
    %215 = vector.extract_strided_slice %212 {offsets = [4, 0], sizes = [2, 4], strides = [1, 1]} : vector<8x4xf32> to vector<2x4xf32>
    %216 = vector.extract_strided_slice %212 {offsets = [6, 0], sizes = [2, 4], strides = [1, 1]} : vector<8x4xf32> to vector<2x4xf32>
    %217 = arith.mulf %214, %197 : vector<2x4xf32>
    %218 = arith.mulf %213, %215 : vector<2x4xf32>
    %219 = arith.addf %217, %218 : vector<2x4xf32>
    %220 = math.tanh %219 : vector<2x4xf32>
    %221 = arith.mulf %216, %220 : vector<2x4xf32>
    %222 = vector.extract_strided_slice %221 {offsets = [0, 0], sizes = [1, 4], strides = [1, 1]} : vector<2x4xf32> to vector<1x4xf32>
    %223 = vector.shape_cast %222 : vector<1x4xf32> to vector<1x4xf32>
    %224 = vector.broadcast %223 : vector<1x4xf32> to vector<8x4xf32>
    %225 = arith.mulf %10, %224 : vector<8x4xf32>
    %226 = arith.addf %65, %225 : vector<8x4xf32>
    %227 = vector.extract_strided_slice %221 {offsets = [1, 0], sizes = [1, 4], strides = [1, 1]} : vector<2x4xf32> to vector<1x4xf32>
    %228 = vector.shape_cast %227 : vector<1x4xf32> to vector<1x4xf32>
    %229 = vector.broadcast %228 : vector<1x4xf32> to vector<8x4xf32>
    %230 = arith.mulf %13, %229 : vector<8x4xf32>
    %231 = arith.addf %226, %230 : vector<8x4xf32>
    %232 = math.tanh %231 : vector<8x4xf32>
    %233 = arith.mulf %232, %22 : vector<8x4xf32>
    %234 = arith.addf %233, %25 : vector<8x4xf32>
    %235 = vector.extract_strided_slice %234 {offsets = [0, 0], sizes = [2, 4], strides = [1, 1]} : vector<8x4xf32> to vector<2x4xf32>
    %236 = vector.extract_strided_slice %234 {offsets = [2, 0], sizes = [2, 4], strides = [1, 1]} : vector<8x4xf32> to vector<2x4xf32>
    %237 = vector.extract_strided_slice %234 {offsets = [4, 0], sizes = [2, 4], strides = [1, 1]} : vector<8x4xf32> to vector<2x4xf32>
    %238 = vector.extract_strided_slice %234 {offsets = [6, 0], sizes = [2, 4], strides = [1, 1]} : vector<8x4xf32> to vector<2x4xf32>
    %239 = arith.mulf %236, %219 : vector<2x4xf32>
    %240 = arith.mulf %235, %237 : vector<2x4xf32>
    %241 = arith.addf %239, %240 : vector<2x4xf32>
    %242 = math.tanh %241 : vector<2x4xf32>
    %243 = arith.mulf %238, %242 : vector<2x4xf32>
    %244 = vector.extract_strided_slice %243 {offsets = [0, 0], sizes = [1, 4], strides = [1, 1]} : vector<2x4xf32> to vector<1x4xf32>
    %c0_8 = arith.constant 0 : index
    %245 = memref.load %arg3[%c0_8] : memref<3xf32, #tpu.memory_space<smem>>
    %246 = vector.broadcast %245 : f32 to vector<1x4xf32>
    %247 = arith.mulf %244, %246 : vector<1x4xf32>
    %248 = vector.extract_strided_slice %243 {offsets = [1, 0], sizes = [1, 4], strides = [1, 1]} : vector<2x4xf32> to vector<1x4xf32>
    %c1 = arith.constant 1 : index
    %249 = memref.load %arg3[%c1] : memref<3xf32, #tpu.memory_space<smem>>
    %250 = vector.broadcast %249 : f32 to vector<1x4xf32>
    %251 = arith.mulf %248, %250 : vector<1x4xf32>
    %252 = arith.addf %247, %251 : vector<1x4xf32>
    %c2 = arith.constant 2 : index
    %253 = memref.load %arg3[%c2] : memref<3xf32, #tpu.memory_space<smem>>
    %254 = vector.broadcast %253 : f32 to vector<1x4xf32>
    %255 = arith.addf %252, %254 : vector<1x4xf32>
    %c0_9 = arith.constant 0 : index
    %c0_10 = arith.constant 0 : index
    %256 = vector.load %arg4[%c0_9, %c0_10] : memref<1x4xf32, #tpu.memory_space<vmem>>, vector<1x4xf32>
    tpu.vector_store %arg4[%c0_9, %c0_10], %255 {strides = array<i32>} : memref<1x4xf32, #tpu.memory_space<vmem>>, vector<1x4xf32>,
    return
  }
  func.func @transform_0(%arg0: i32) -> (i32, i32) {
    %c0_i32 = arith.constant 0 : i32
    %c0_i32_0 = arith.constant 0 : i32
    return %c0_i32, %arg0 : i32, i32
  }
  func.func @transform_1(%arg0: i32) -> (i32, i32) {
    %c0_i32 = arith.constant 0 : i32
    %c0_i32_0 = arith.constant 0 : i32
    %c0_i32_1 = arith.constant 0 : i32
    return %c0_i32, %c0_i32_0 : i32, i32
  }
  func.func @transform_2(%arg0: i32) -> i32 {
    %c0_i32 = arith.constant 0 : i32
    %c0_i32_0 = arith.constant 0 : i32
    return %c0_i32 : i32
  }
  func.func @transform_3(%arg0: i32) -> (i32, i32) {
    %c0_i32 = arith.constant 0 : i32
    %c0_i32_0 = arith.constant 0 : i32
    return %c0_i32, %arg0 : i32, i32
  }
}

</mosaic_0001>

<llo_original>
// kernel: lstm_forward.1
$region0: #{lstm_forward.1}
  #allocation0 [shape = 'u32[]', space=smem, size = 0x4, offset = 0x4, fixed_abs, tag = 'smem constant byte address 0x4 - core index']
  #allocation1 [shape = 'u32[144,128]{1,0:T(1,128)}', space=vmem, size = 0x12000, scoped, tag = 'internal scratch']
  %s0 = inlined_call_operand.vmem [shape: f32[8,4], index: 0, kind: input, shape index: {}]
  %s1 = inlined_call_operand.vmem [shape: f32[8,4], index: 1, kind: input, shape index: {}]
  %s2 = inlined_call_operand.vmem [shape: f32[3], index: 2, kind: input, shape index: {}]
  %s3 = inlined_call_operand.hbm [shape: f32[1,4], index: 3, kind: output, shape index: {}]
  %s4 = sld [smem:[#allocation0]]
  $region26: #{lstm_forward.1} parent=0
    _
  %s6 = ssub.s32 1, %s4
  %s7 = scalar_select 0, %s6, %s4
  $region1: #{lstm_forward.1} parent=0
    #allocation2 [shape = 'u8[512]{0}', space=smem, size = 0x200, scoped, tag = 'input window, operand 2, single buffered']
    #allocation3 [shape = 's32[1]{0}', space=sflag, size = 0x4, scoped, tag = 'scoped memory for lstm_forward.1']
    #allocation4 [shape = 's32[1]{0}', space=sflag, size = 0x4, scoped, tag = 'scoped memory for lstm_forward.1']
    #allocation5 [shape = 'u8[512]{0}', space=vmem, size = 0x400, scoped, tag = 'output window, operand 0, single buffered']
    %8 = vsyncpa [#allocation4], 0
    %9 = vsyncpa [#allocation3], 0
    // Predicated region
    $region2: #{lstm_forward.1} parent=1 // pred_check
      _
    $region3: #{lstm_forward.1} parent=1 // pred_check_branch
      %11 = sbr.rel (0) target = $region5
    $region4: #{lstm_forward.1} parent=1 // pred_region
      _
    $region5: #{lstm_forward.1} parent=1 // pred_fallthru
      _
    // Predicated region
    $region6: #{lstm_forward.1} parent=1 // pred_check
      _
    $region7: #{lstm_forward.1} parent=1 // pred_check_branch
      %13 = sbr.rel (0) target = $region9
    $region8: #{lstm_forward.1} parent=1 // pred_region
      _
    $region9: #{lstm_forward.1} parent=1 // pred_fallthru
      _
    // Predicated region
    $region10: #{lstm_forward.1} parent=1 // pred_check
      _
    $region11: #{lstm_forward.1} parent=1 // pred_check_branch
      %15 = sbr.rel (0) target = $region13
    $region12: #{lstm_forward.1} parent=1 // pred_region
      %s17 = ssub.s32 16, 16
      %18 = vsyncadd [#allocation4], %s17
      %s20 = sshll.u32 %s2, 4
      %s21 = int_to_ptr.vmem [resolvable:$true] %s20
      %23 = dma.vmem_to_smem %s21, 16, [#allocation2], [#allocation4]
    $region13: #{lstm_forward.1} parent=1 // pred_fallthru
      _
    // Predicated region
    $region14: #{lstm_forward.1} parent=1 // pred_check
      _
    $region15: #{lstm_forward.1} parent=1 // pred_check_branch
      %25 = sbr.rel (0) target = $region17
    $region16: #{lstm_forward.1} parent=1 // pred_region
      %26 = dma.done [#allocation4], 16
    $region17: #{lstm_forward.1} parent=1 // pred_fallthru
      _
    %27 = sfence
    %v28 = vld [vmem:[%s0] sm:$0xff]
    %v29 = vld [vmem:[%s1] sm:$0xff]
    %31 = vset.pattern.permute.xlu0 0
    %32 = vperm.xlu0 %31, %v29
    %v33 = vpop.permute.xlu0 %32
    %35 = vset.pattern.permute.xlu0 1
    %36 = vperm.xlu0 %35, %v29
    %v37 = vpop.permute.xlu0 %36
    %39 = vset.pattern.permute.xlu0 2
    %40 = vperm.xlu0 %39, %v29
    %v41 = vpop.permute.xlu0 %40
    %43 = vset.pattern.permute.xlu0 3
    %44 = vperm.xlu0 %43, %v29
    %v45 = vpop.permute.xlu0 %44
    %v47 = vlaneseq
    %v48 = vshrl.u32 %v47, 7
    %vm49 = vcmp.ge.s32.totalorder %v48, 4
    %vm50 = vcmp.lt.s32.totalorder %v48, 6
    %vm51 = vmand %vm49, %vm50
    %v52 = vsel %vm51, 1.0, 0.5
    %v53 = vsel %vm51, 0.0, 0.5
    %v54 = vlaneseq
    %v55 = vshrl.u32 %v54, 7
    %v56 = vsub.s32 0, %v55
    %v57 = vrot.slane %v28, %v56
    %v58 = vmul.f32 %v57, %v33
    %v59 = vadd.f32 %v58, %v37
    %v60 = vlaneseq
    %v61 = vshrl.u32 %v60, 7
    %v62 = vsub.s32 1, %v61
    %v63 = vrot.slane %v28, %v62
    %v64 = vmul.f32 %v63, %v33
    %v65 = vadd.f32 %v64, %v37
    %v66 = vlaneseq
    %v67 = vshrl.u32 %v66, 7
    %v68 = vsub.s32 2, %v67
    %v69 = vrot.slane %v28, %v68
    %v70 = vmul.f32 %v69, %v33
    %v71 = vadd.f32 %v70, %v37
    %v72 = vlaneseq
    %v73 = vshrl.u32 %v72, 7
    %v74 = vsub.s32 3, %v73
    %v75 = vrot.slane %v28, %v74
    %v76 = vmul.f32 %v75, %v33
    %v77 = vadd.f32 %v76, %v37
    %v78 = vlaneseq
    %v79 = vshrl.u32 %v78, 7
    %v80 = vsub.s32 4, %v79
    %v81 = vrot.slane %v28, %v80
    %v82 = vmul.f32 %v81, %v33
    %v83 = vadd.f32 %v82, %v37
    %v84 = vlaneseq
    %v85 = vshrl.u32 %v84, 7
    %v86 = vsub.s32 5, %v85
    %v87 = vrot.slane %v28, %v86
    %v88 = vmul.f32 %v87, %v33
    %v89 = vadd.f32 %v88, %v37
    %v90 = vlaneseq
    %v91 = vshrl.u32 %v90, 7
    %v92 = vsub.s32 6, %v91
    %v93 = vrot.slane %v28, %v92
    %v94 = vmul.f32 %v93, %v33
    %v95 = vadd.f32 %v94, %v37
    %v96 = vlaneseq
    %v97 = vshrl.u32 %v96, 7
    %v98 = vsub.s32 7, %v97
    %v99 = vrot.slane %v28, %v98
    %v100 = vmul.f32 %v99, %v33
    %v101 = vadd.f32 %v100, %v37
    %v102 = vmul.f32 %v41, 0.0
    %v103 = vadd.f32 %v59, %v102
    %v104 = vmul.f32 %v45, 0.0
    %v105 = vadd.f32 %v103, %v104
    %v106 = vtanh.pop %v105
    %v107 = vmul.f32 %v106, %v52
    %v108 = vadd.f32 %v107, %v53
    %v109 = vmul.f32 %v108, 0.0
    %v111 = vrot.slane %v108, 4
    %v113 = vmul.f32 %v108, %v111
    %v115 = vrot.slane %v113, 6
    %v117 = vadd.f32 %v109, %v115
    %v118 = vtanh.pop %v117
    %v120 = vrot.slane %v118, 4
    %v122 = vmul.f32 %v108, %v120
    %v123 = vlaneseq
    %v124 = vshrl.u32 %v123, 7
    %v125 = vsub.s32 6, %v124
    %v126 = vrot.slane %v122, %v125
    %v127 = vmul.f32 %v41, %v126
    %v128 = vadd.f32 %v65, %v127
    %v129 = vlaneseq
    %v130 = vshrl.u32 %v129, 7
    %v131 = vsub.s32 7, %v130
    %v132 = vrot.slane %v122, %v131
    %v133 = vmul.f32 %v45, %v132
    %v134 = vadd.f32 %v128, %v133
    %v135 = vtanh.pop %v134
    %v136 = vmul.f32 %v135, %v52
    %v137 = vadd.f32 %v136, %v53
    %v138 = vmul.f32 %v137, %v117
    %v140 = vrot.slane %v137, 4
    %v142 = vmul.f32 %v137, %v140
    %v144 = vrot.slane %v142, 6
    %v146 = vadd.f32 %v138, %v144
    %v147 = vtanh.pop %v146
    %v149 = vrot.slane %v147, 4
    %v151 = vmul.f32 %v137, %v149
    %v152 = vlaneseq
    %v153 = vshrl.u32 %v152, 7
    %v154 = vsub.s32 6, %v153
    %v155 = vrot.slane %v151, %v154
    %v156 = vmul.f32 %v41, %v155
    %v157 = vadd.f32 %v71, %v156
    %v158 = vlaneseq
    %v159 = vshrl.u32 %v158, 7
    %v160 = vsub.s32 7, %v159
    %v161 = vrot.slane %v151, %v160
    %v162 = vmul.f32 %v45, %v161
    %v163 = vadd.f32 %v157, %v162
    %v164 = vtanh.pop %v163
    %v165 = vmul.f32 %v164, %v52
    %v166 = vadd.f32 %v165, %v53
    %v167 = vmul.f32 %v166, %v146
    %v169 = vrot.slane %v166, 4
    %v171 = vmul.f32 %v166, %v169
    %v173 = vrot.slane %v171, 6
    %v175 = vadd.f32 %v167, %v173
    %v176 = vtanh.pop %v175
    %v178 = vrot.slane %v176, 4
    %v180 = vmul.f32 %v166, %v178
    %v181 = vlaneseq
    %v182 = vshrl.u32 %v181, 7
    %v183 = vsub.s32 6, %v182
    %v184 = vrot.slane %v180, %v183
    %v185 = vmul.f32 %v41, %v184
    %v186 = vadd.f32 %v77, %v185
    %v187 = vlaneseq
    %v188 = vshrl.u32 %v187, 7
    %v189 = vsub.s32 7, %v188
    %v190 = vrot.slane %v180, %v189
    %v191 = vmul.f32 %v45, %v190
    %v192 = vadd.f32 %v186, %v191
    %v193 = vtanh.pop %v192
    %v194 = vmul.f32 %v193, %v52
    %v195 = vadd.f32 %v194, %v53
    %v196 = vmul.f32 %v195, %v175
    %v198 = vrot.slane %v195, 4
    %v200 = vmul.f32 %v195, %v198
    %v202 = vrot.slane %v200, 6
    %v204 = vadd.f32 %v196, %v202
    %v205 = vtanh.pop %v204
    %v207 = vrot.slane %v205, 4
    %v209 = vmul.f32 %v195, %v207
    %v210 = vlaneseq
    %v211 = vshrl.u32 %v210, 7
    %v212 = vsub.s32 6, %v211
    %v213 = vrot.slane %v209, %v212
    %v214 = vmul.f32 %v41, %v213
    %v215 = vadd.f32 %v83, %v214
    %v216 = vlaneseq
    %v217 = vshrl.u32 %v216, 7
    %v218 = vsub.s32 7, %v217
    %v219 = vrot.slane %v209, %v218
    %v220 = vmul.f32 %v45, %v219
    %v221 = vadd.f32 %v215, %v220
    %v222 = vtanh.pop %v221
    %v223 = vmul.f32 %v222, %v52
    %v224 = vadd.f32 %v223, %v53
    %v225 = vmul.f32 %v224, %v204
    %v227 = vrot.slane %v224, 4
    %v229 = vmul.f32 %v224, %v227
    %v231 = vrot.slane %v229, 6
    %v233 = vadd.f32 %v225, %v231
    %v234 = vtanh.pop %v233
    %v236 = vrot.slane %v234, 4
    %v238 = vmul.f32 %v224, %v236
    %v239 = vlaneseq
    %v240 = vshrl.u32 %v239, 7
    %v241 = vsub.s32 6, %v240
    %v242 = vrot.slane %v238, %v241
    %v243 = vmul.f32 %v41, %v242
    %v244 = vadd.f32 %v89, %v243
    %v245 = vlaneseq
    %v246 = vshrl.u32 %v245, 7
    %v247 = vsub.s32 7, %v246
    %v248 = vrot.slane %v238, %v247
    %v249 = vmul.f32 %v45, %v248
    %v250 = vadd.f32 %v244, %v249
    %v251 = vtanh.pop %v250
    %v252 = vmul.f32 %v251, %v52
    %v253 = vadd.f32 %v252, %v53
    %v254 = vmul.f32 %v253, %v233
    %v256 = vrot.slane %v253, 4
    %v258 = vmul.f32 %v253, %v256
    %v260 = vrot.slane %v258, 6
    %v262 = vadd.f32 %v254, %v260
    %v263 = vtanh.pop %v262
    %v265 = vrot.slane %v263, 4
    %v267 = vmul.f32 %v253, %v265
    %v268 = vlaneseq
    %v269 = vshrl.u32 %v268, 7
    %v270 = vsub.s32 6, %v269
    %v271 = vrot.slane %v267, %v270
    %v272 = vmul.f32 %v41, %v271
    %v273 = vadd.f32 %v95, %v272
    %v274 = vlaneseq
    %v275 = vshrl.u32 %v274, 7
    %v276 = vsub.s32 7, %v275
    %v277 = vrot.slane %v267, %v276
    %v278 = vmul.f32 %v45, %v277
    %v279 = vadd.f32 %v273, %v278
    %v280 = vtanh.pop %v279
    %v281 = vmul.f32 %v280, %v52
    %v282 = vadd.f32 %v281, %v53
    %v283 = vmul.f32 %v282, %v262
    %v285 = vrot.slane %v282, 4
    %v287 = vmul.f32 %v282, %v285
    %v289 = vrot.slane %v287, 6
    %v291 = vadd.f32 %v283, %v289
    %v292 = vtanh.pop %v291
    %v294 = vrot.slane %v292, 4
    %v296 = vmul.f32 %v282, %v294
    %v297 = vlaneseq
    %v298 = vshrl.u32 %v297, 7
    %v299 = vsub.s32 6, %v298
    %v300 = vrot.slane %v296, %v299
    %v301 = vmul.f32 %v41, %v300
    %v302 = vadd.f32 %v101, %v301
    %v303 = vlaneseq
    %v304 = vshrl.u32 %v303, 7
    %v305 = vsub.s32 7, %v304
    %v306 = vrot.slane %v296, %v305
    %v307 = vmul.f32 %v45, %v306
    %v308 = vadd.f32 %v302, %v307
    %v309 = vtanh.pop %v308
    %v310 = vmul.f32 %v309, %v52
    %v311 = vadd.f32 %v310, %v53
    %v312 = vmul.f32 %v311, %v291
    %v314 = vrot.slane %v311, 4
    %v316 = vmul.f32 %v311, %v314
    %v318 = vrot.slane %v316, 6
    %v320 = vadd.f32 %v312, %v318
    %v321 = vtanh.pop %v320
    %v323 = vrot.slane %v321, 4
    %v325 = vmul.f32 %v311, %v323
    %s326 = sld [smem:[#allocation2]]
    %v327 = vstv %s326
    %v328 = vmul.f32 %v325, %v327
    %s329 = sld [smem:[#allocation2 + $0x1]]
    %v330 = vstv %s329
    %v331 = vmul.f32 %v325, %v330
    %v333 = vrot.slane %v331, 1
    %v335 = vadd.f32 %v328, %v333
    %s336 = sld [smem:[#allocation2 + $0x2]]
    %v337 = vstv %s336
    %v338 = vadd.f32 %v335, %v337
    %vm339 = vcmask 30726
    %340 = vst.msk [vmem:[#allocation5 - $0x6] sm:$0x40] %vm339, %v338
    // Predicated region
    $region18: #{lstm_forward.1} parent=1 // pred_check
      _
    $region19: #{lstm_forward.1} parent=1 // pred_check_branch
      %342 = sbr.rel (0) target = $region21
    $region20: #{lstm_forward.1} parent=1 // pred_region
      %s344 = ssub.s32 16, 16
      %345 = vsyncadd [#allocation3], %s344
      %s347 = sshll.u32 [#allocation5], 4
      %s348 = int_to_ptr.vmem [resolvable:$true] %s347
      %350 = dma.vmem_to_hbm [thread:$0]  %s348, 16, %s3, [#allocation3]
    $region21: #{lstm_forward.1} parent=1 // pred_fallthru
      _
    // Predicated region
    $region22: #{lstm_forward.1} parent=1 // pred_check
      _
    $region23: #{lstm_forward.1} parent=1 // pred_check_branch
      %352 = sbr.rel (0) target = $region25
    $region24: #{lstm_forward.1} parent=1 // pred_region
      %353 = dma.done [#allocation3], 16
    $region25: #{lstm_forward.1} parent=1 // pred_fallthru
      _
    %354 = vsyncpa [#allocation3], 1
    %355 = vsyncpa [#allocation4], 1

</llo_original>
